<compile_context>
chip_gen: v7x
topology: tpu7x:2x2x1
jax: 0.10.0
libtpu: 0.0.40
codegen_flags: <defaults>
</compile_context>

<pallas_src>
import math

import jax
import jax.numpy as jnp
from jax import lax
from jax.experimental import pallas as pl
from jax.experimental.pallas import tpu as pltpu


# ----------------------------------------------------------------------------
# Kernel: fused (conv3x3 + BN + ReLU) x 2 for B batch elements per grid step
# ----------------------------------------------------------------------------
def _double_conv_kernel(x_ref, w1_ref, b1_ref, w2_ref, b2_ref, o_ref,
                        xpad_ref, ypad_ref):
    """Fused DoubleConv for a block of B batch elements.

    x_ref:    (B, H, W*Cin)       bf16 input, row-flattened NHWC
    w1_ref:   (3, W*Cin, W*Cout)  bf16 banded conv1 weights (dy-indexed, BN scale folded)
    b1_ref:   (1, W*Cout)         f32 folded BN bias, tiled across W
    w2_ref:   (3, W*Cout, W*Cout) bf16 banded conv2 weights
    b2_ref:   (1, W*Cout)         f32
    o_ref:    (B, H, W*Cout)      f32 output
    xpad_ref: (B, H+2, W*Cin)     bf16 VMEM scratch, per-image vertical halo (layer 1)
    ypad_ref: (B, H+2, W*Cout)    bf16 VMEM scratch, layer-1 output + vertical halo
    """
    B, H = o_ref.shape[0], o_ref.shape[1]
    wcin = x_ref.shape[2]
    wcout = o_ref.shape[2]
    BH = B * H

    # Per-image vertical zero halo (rows 0 and H+1 of every batch element).
    # Re-written every grid step so the kernel stays correct when grid steps
    # are sharded across TensorCores.
    zx = jnp.zeros((B, 1, wcin), xpad_ref.dtype)
    zy = jnp.zeros((B, 1, wcout), ypad_ref.dtype)
    xpad_ref[:, 0:1, :] = zx
    xpad_ref[:, H + 1:H + 2, :] = zx
    ypad_ref[:, 0:1, :] = zy
    ypad_ref[:, H + 1:H + 2, :] = zy

    # ---- layer 1: conv3x3 (BN scale folded into weights) + bias + ReLU ----
    xpad_ref[:, 1:H + 1, :] = x_ref[...]                      # bf16 -> bf16, no cast
    # One full-width banded matmul per dy tap with M = B*H rows; the dy-shifted
    # view is flattened to (B*H, W*Cin) only AFTER the per-image slice so rows
    # never bleed between batch elements.
    acc = jnp.dot(xpad_ref[:, 0:H, :].reshape(BH, wcin), w1_ref[0],
                  preferred_element_type=jnp.float32)
    for dy in (1, 2):
        acc = acc + jnp.dot(xpad_ref[:, dy:dy + H, :].reshape(BH, wcin),
                            w1_ref[dy], preferred_element_type=jnp.float32)
    y1 = jnp.maximum(acc + b1_ref[...], 0.0)                  # f32 epilogue

    # ---- layer 2 ----
    ypad_ref[:, 1:H + 1, :] = y1.reshape(B, H, wcout).astype(ypad_ref.dtype)
    acc2 = jnp.dot(ypad_ref[:, 0:H, :].reshape(BH, wcout), w2_ref[0],
                   preferred_element_type=jnp.float32)
    for dy in (1, 2):
        acc2 = acc2 + jnp.dot(ypad_ref[:, dy:dy + H, :].reshape(BH, wcout),
                              w2_ref[dy], preferred_element_type=jnp.float32)

    # Accumulator already has the output-block layout -> lane-dense store.
    o_ref[...] = jnp.maximum(acc2 + b2_ref[...], 0.0).reshape(
        B, H, wcout).astype(o_ref.dtype)


# ----------------------------------------------------------------------------
# Wrapper-side weight preparation
# ----------------------------------------------------------------------------
def _banded_conv_weights(w_hwio, W):
    """Expand a 3x3 HWIO conv weight into 3 banded matrices, one per dy.

    band[dy, xk*Cin + ci, x*Cout + co] = w[dy, dx, ci, co]  where xk = x + dx - 1
    and out-of-range xk terms are dropped (they correspond to the zero padding),
    so a single (M, W*Cin) @ (W*Cin, W*Cout) matmul per dy computes the whole
    width of the 'same'-padded convolution.
    """
    kh, kw, cin, cout = w_hwio.shape
    xk = jnp.arange(W)[None, :, None]         # source column
    xo = jnp.arange(W)[None, None, :]         # output column
    dx = jnp.arange(kw)[:, None, None]
    sel = (xk == xo + dx - 1).astype(w_hwio.dtype)        # (3, W, W)
    band = jnp.einsum('dkx,ydic->ykixc', sel, w_hwio)     # (3, W, Cin, W, Cout)
    return band.reshape(kh, W * cin, W * cout)


def torch_conv_weight_to_hwio(w_oihw):
    """PyTorch Conv2d weights are (Cout, Cin, kh, kw); convert to HWIO."""
    return jnp.transpose(w_oihw, (2, 3, 1, 0))


def _pick_batch_block(N, H, rows_target=256, rows_max=2048):
    """Pick B (batch elements per grid step).

    Prefers the smallest divisor B of N with B*H >= rows_target (fills MXU
    rows on v6e/v7x), subject to B*H <= rows_max (VMEM) and B <= N//2 when
    N >= 2 so megacore parts keep >= 2 grid steps to split across TensorCores.
    """
    limit = max(1, N // 2) if N >= 2 else 1
    cands = [d for d in range(1, limit + 1) if N % d == 0 and d * H <= rows_max]
    if not cands:
        cands = [1]
    reaching = [d for d in cands if d * H >= rows_target]
    return min(reaching) if reaching else max(cands)


# ----------------------------------------------------------------------------
# pallas_call wrapper
# ----------------------------------------------------------------------------
def _double_conv_pallas(x_flat, wband1, bias1, wband2, bias2, *, H, W, Cin,
                        Cout, B):
    N = x_flat.shape[0]
    assert N % B == 0, (N, B)
    wcin, wcout = W * Cin, W * Cout

    # Per-step VMEM footprint (double-buffered I/O blocks + constant operands
    # + bf16 scratch) with headroom; clamp so it stays sane on v7x (64 MiB).
    vmem_need = (2 * B * H * wcin * 2 + 2 * B * H * wcout * 4
                 + 2 * 3 * wcin * wcout * 2 + 2 * 3 * wcout * wcout * 2
                 + 4 * wcout * 4
                 + B * (H + 2) * (wcin + wcout) * 2)
    vmem_limit = max(32 * 1024 * 1024,
                     min(int(1.5 * vmem_need) + (1 << 20), 96 * 1024 * 1024))

    return pl.pallas_call(
        _double_conv_kernel,
        out_shape=jax.ShapeDtypeStruct((N, H, wcout), jnp.float32),
        grid_spec=pltpu.PrefetchScalarGridSpec(
            num_scalar_prefetch=0,
            grid=(N // B,),
            in_specs=[
                pl.BlockSpec((B, H, wcin), lambda b: (b, 0, 0)),
                pl.BlockSpec((3, wcin, wcout), lambda b: (0, 0, 0)),
                pl.BlockSpec((1, wcout), lambda b: (0, 0)),
                pl.BlockSpec((3, wcout, wcout), lambda b: (0, 0, 0)),
                pl.BlockSpec((1, wcout), lambda b: (0, 0)),
            ],
            out_specs=pl.BlockSpec((B, H, wcout), lambda b: (b, 0, 0)),
            scratch_shapes=[
                pltpu.VMEM((B, H + 2, wcin), jnp.bfloat16),
                pltpu.VMEM((B, H + 2, wcout), jnp.bfloat16),
            ],
        ),
        compiler_params=pltpu.CompilerParams(
            dimension_semantics=("parallel",),   # shard grid steps across TCs (v7x)
            vmem_limit_bytes=vmem_limit,
        ),
    )(x_flat, wband1, bias1, wband2, bias2)


# ----------------------------------------------------------------------------
# Parameters (synthetic, PyTorch InConv-compatible shapes, eval-mode BN folded)
# ----------------------------------------------------------------------------
def init_inconv_params(key, in_ch, out_ch):
    k1, k2, k3, k4 = jax.random.split(key, 4)
    eps = 1e-5
    params = {}
    # layer 1: Conv2d(in_ch, out_ch, 3, padding=1) + BatchNorm2d(out_ch)
    w1 = 0.1 * jax.random.normal(k1, (3, 3, in_ch, out_ch), jnp.float32)   # HWIO
    b1 = 0.1 * jax.random.normal(k2, (out_ch,), jnp.float32)
    gamma1, beta1 = jnp.ones((out_ch,)), jnp.zeros((out_ch,))
    mean1, var1 = jnp.zeros((out_ch,)), jnp.ones((out_ch,))
    s1 = gamma1 / jnp.sqrt(var1 + eps)
    params["w1"] = w1 * s1[None, None, None, :]          # BN scale folded into weights
    params["bias1"] = s1 * (b1 - mean1) + beta1
    # layer 2: Conv2d(out_ch, out_ch, 3, padding=1) + BatchNorm2d(out_ch)
    w2 = 0.1 * jax.random.normal(k3, (3, 3, out_ch, out_ch), jnp.float32)
    b2 = 0.1 * jax.random.normal(k4, (out_ch,), jnp.float32)
    gamma2, beta2 = jnp.ones((out_ch,)), jnp.zeros((out_ch,))
    mean2, var2 = jnp.zeros((out_ch,)), jnp.ones((out_ch,))
    s2 = gamma2 / jnp.sqrt(var2 + eps)
    params["w2"] = w2 * s2[None, None, None, :]
    params["bias2"] = s2 * (b2 - mean2) + beta2
    return params


# ----------------------------------------------------------------------------
# Forward (NCHW in / NCHW out, PyTorch convention)
# ----------------------------------------------------------------------------
def inconv_forward(x_nchw, params):
    N, Cin, H, W = x_nchw.shape
    Cout = params["w1"].shape[-1]

    # Zero-pad Cin (when cheap, <= 2x) so the layer-1 lane width W*Cin is a
    # multiple of 128: lane-dense input vregs and full-width layer-1 K feed.
    # Zero channels in both x and w1 contribute nothing, so results are exact.
    step = 128 // math.gcd(W, 128)
    cin_pad = -(-Cin // step) * step
    if cin_pad > 2 * Cin:
        cin_pad = Cin

    w1 = params["w1"]
    x_nhwc = jnp.transpose(x_nchw, (0, 2, 3, 1))
    if cin_pad != Cin:
        w1 = jnp.pad(w1, ((0, 0), (0, 0), (0, cin_pad - Cin), (0, 0)))
        x_nhwc = jnp.pad(x_nhwc, ((0, 0), (0, 0), (0, 0), (0, cin_pad - Cin)))

    # NCHW -> row-flattened NHWC, bf16 activations for the MXU (f32 accumulate).
    x_flat = x_nhwc.reshape(N, H, W * cin_pad).astype(jnp.bfloat16)

    wband1 = _banded_conv_weights(w1, W).astype(jnp.bfloat16)
    wband2 = _banded_conv_weights(params["w2"], W).astype(jnp.bfloat16)
    bias1 = jnp.tile(params["bias1"], W).reshape(1, W * Cout).astype(jnp.float32)
    bias2 = jnp.tile(params["bias2"], W).reshape(1, W * Cout).astype(jnp.float32)

    B = _pick_batch_block(N, H)
    y_flat = _double_conv_pallas(x_flat, wband1, bias1, wband2, bias2,
                                 H=H, W=W, Cin=cin_pad, Cout=Cout, B=B)
    return jnp.transpose(y_flat.reshape(N, H, W, Cout), (0, 3, 1, 2))


def _reference_forward(x_nchw, params):
    """Pure-JAX f32 reference (same folded eval-mode BN semantics)."""
    x = jnp.transpose(x_nchw, (0, 2, 3, 1))
    dn = lax.conv_dimension_numbers(x.shape, params["w1"].shape,
                                    ('NHWC', 'HWIO', 'NHWC'))
    y = lax.conv_general_dilated(x, params["w1"], (1, 1), 'SAME',
                                 dimension_numbers=dn)
    y = jnp.maximum(y + params["bias1"], 0.0)
    dn2 = lax.conv_dimension_numbers(y.shape, params["w2"].shape,
                                     ('NHWC', 'HWIO', 'NHWC'))
    y = lax.conv_general_dilated(y, params["w2"], (1, 1), 'SAME',
                                 dimension_numbers=dn2)
    y = jnp.maximum(y + params["bias2"], 0.0)
    return jnp.transpose(y, (0, 3, 1, 2))


if __name__ == "__main__":
    key = jax.random.PRNGKey(0)
    kx, kp = jax.random.split(key)

    N, in_ch, out_ch, H, W = 2, 4, 8, 16, 16
    x = jax.random.normal(kx, (N, in_ch, H, W), jnp.float32)   # NCHW, like PyTorch
    params = init_inconv_params(kp, in_ch, out_ch)

    fwd = jax.jit(inconv_forward)
    out = fwd(x, params)
    jax.block_until_ready(out)

    assert out.shape == (N, out_ch, H, W), out.shape
    assert bool(jnp.all(out >= 0.0))                           # ReLU output is non-negative

    ref = _reference_forward(x, params)
    max_err = float(jnp.max(jnp.abs(out - ref)))
    assert max_err < 5e-2, f"max abs error vs f32 reference: {max_err}"

    print("KERNEL_OK")
</pallas_src>

<mosaic_0001>
module attributes {stable_mosaic.version = 11 : i64} {
  func.func @_double_conv_kernel(%arg0: i32, %arg1: memref<1x16x128xbf16, #tpu.memory_space<vmem>>, %arg2: memref<3x128x128xbf16, #tpu.memory_space<vmem>>, %arg3: memref<1x128xf32, #tpu.memory_space<vmem>>, %arg4: memref<3x128x128xbf16, #tpu.memory_space<vmem>>, %arg5: memref<1x128xf32, #tpu.memory_space<vmem>>, %arg6: memref<1x16x128xf32, #tpu.memory_space<vmem>>, %arg7: memref<1x18x128xbf16, #tpu.memory_space<vmem>>, %arg8: memref<1x18x128xbf16, #tpu.memory_space<vmem>>) attributes {dimension_semantics = [#tpu.dimension_semantics<parallel>], iteration_bounds = array<i64: 2>, scalar_prefetch = 0 : i64, scratch_operands = 2 : i64, tpu.core_type = #tpu.core_type<tc>, window_params = [{transform_indices = @transform_0, window_bounds = array<i64: 1, 16, 128>}, {pipeline_mode = #tpu.pipeline_mode<synchronous>, transform_indices = @transform_1, window_bounds = array<i64: 3, 128, 128>}, {pipeline_mode = #tpu.pipeline_mode<synchronous>, transform_indices = @transform_2, window_bounds = array<i64: 1, 128>}, {pipeline_mode = #tpu.pipeline_mode<synchronous>, transform_indices = @transform_3, window_bounds = array<i64: 3, 128, 128>}, {pipeline_mode = #tpu.pipeline_mode<synchronous>, transform_indices = @transform_4, window_bounds = array<i64: 1, 128>}, {transform_indices = @transform_5, window_bounds = array<i64: 1, 16, 128>}]} {
    %cst = arith.constant 0.000000e+00 : bf16
    %0 = vector.broadcast %cst : bf16 to vector<1x1x128xbf16>
    %cst_0 = arith.constant 0.000000e+00 : bf16
    %1 = vector.broadcast %cst_0 : bf16 to vector<1x1x128xbf16>
    %c0 = arith.constant 0 : index
    %c0_1 = arith.constant 0 : index
    %c0_2 = arith.constant 0 : index
    %2 = vector.load %arg7[%c0, %c0_1, %c0_2] : memref<1x18x128xbf16, #tpu.memory_space<vmem>>, vector<1x1x128xbf16>
    tpu.vector_store %arg7[%c0, %c0_1, %c0_2], %0 {strides = array<i32>} : memref<1x18x128xbf16, #tpu.memory_space<vmem>>, vector<1x1x128xbf16>,
    %c0_3 = arith.constant 0 : index
    %c17 = arith.constant 17 : index
    %c0_4 = arith.constant 0 : index
    %3 = vector.load %arg7[%c0_3, %c17, %c0_4] : memref<1x18x128xbf16, #tpu.memory_space<vmem>>, vector<1x1x128xbf16>
    tpu.vector_store %arg7[%c0_3, %c17, %c0_4], %0 {strides = array<i32>} : memref<1x18x128xbf16, #tpu.memory_space<vmem>>, vector<1x1x128xbf16>,
    %c0_5 = arith.constant 0 : index
    %c0_6 = arith.constant 0 : index
    %c0_7 = arith.constant 0 : index
    %4 = vector.load %arg8[%c0_5, %c0_6, %c0_7] : memref<1x18x128xbf16, #tpu.memory_space<vmem>>, vector<1x1x128xbf16>
    tpu.vector_store %arg8[%c0_5, %c0_6, %c0_7], %1 {strides = array<i32>} : memref<1x18x128xbf16, #tpu.memory_space<vmem>>, vector<1x1x128xbf16>,
    %c0_8 = arith.constant 0 : index
    %c17_9 = arith.constant 17 : index
    %c0_10 = arith.constant 0 : index
    %5 = vector.load %arg8[%c0_8, %c17_9, %c0_10] : memref<1x18x128xbf16, #tpu.memory_space<vmem>>, vector<1x1x128xbf16>
    tpu.vector_store %arg8[%c0_8, %c17_9, %c0_10], %1 {strides = array<i32>} : memref<1x18x128xbf16, #tpu.memory_space<vmem>>, vector<1x1x128xbf16>,
    %c0_11 = arith.constant 0 : index
    %c0_12 = arith.constant 0 : index
    %c0_13 = arith.constant 0 : index
    %6 = vector.load %arg1[%c0_11, %c0_12, %c0_13] : memref<1x16x128xbf16, #tpu.memory_space<vmem>>, vector<1x16x128xbf16>
    %c0_14 = arith.constant 0 : index
    %c1 = arith.constant 1 : index
    %c0_15 = arith.constant 0 : index
    %7 = vector.load %arg7[%c0_14, %c1, %c0_15] : memref<1x18x128xbf16, #tpu.memory_space<vmem>>, vector<1x16x128xbf16>
    tpu.vector_store %arg7[%c0_14, %c1, %c0_15], %6 {strides = array<i32>} : memref<1x18x128xbf16, #tpu.memory_space<vmem>>, vector<1x16x128xbf16>,
    %c0_16 = arith.constant 0 : index
    %c0_17 = arith.constant 0 : index
    %c0_18 = arith.constant 0 : index
    %8 = vector.load %arg7[%c0_16, %c0_17, %c0_18] : memref<1x18x128xbf16, #tpu.memory_space<vmem>>, vector<1x16x128xbf16>
    %9 = vector.shape_cast %8 : vector<1x16x128xbf16> to vector<16x128xbf16>
    %c0_19 = arith.constant 0 : index
    %c0_20 = arith.constant 0 : index
    %c0_21 = arith.constant 0 : index
    %10 = vector.load %arg2[%c0_19, %c0_20, %c0_21] : memref<3x128x128xbf16, #tpu.memory_space<vmem>>, vector<1x128x128xbf16>
    %11 = vector.shape_cast %10 : vector<1x128x128xbf16> to vector<128x128xbf16>
    %cst_22 = arith.constant dense<0.000000e+00> : vector<16x128xf32>
    %12 = tpu.matmul %9, %11, %cst_22 {dimension_numbers = #tpu.dot_dimension_numbers<[1], [0], [0], [1], [0, 0, 1, 1], [], []>} : vector<16x128xbf16>, vector<128x128xbf16>, vector<16x128xf32> -> vector<16x128xf32>
    %c0_23 = arith.constant 0 : index
    %c1_24 = arith.constant 1 : index
    %c0_25 = arith.constant 0 : index
    %13 = vector.load %arg7[%c0_23, %c1_24, %c0_25] : memref<1x18x128xbf16, #tpu.memory_space<vmem>>, vector<1x16x128xbf16>
    %14 = vector.shape_cast %13 : vector<1x16x128xbf16> to vector<16x128xbf16>
    %c1_26 = arith.constant 1 : index
    %c0_27 = arith.constant 0 : index
    %c0_28 = arith.constant 0 : index
    %15 = vector.load %arg2[%c1_26, %c0_27, %c0_28] : memref<3x128x128xbf16, #tpu.memory_space<vmem>>, vector<1x128x128xbf16>
    %16 = vector.shape_cast %15 : vector<1x128x128xbf16> to vector<128x128xbf16>
    %cst_29 = arith.constant dense<0.000000e+00> : vector<16x128xf32>
    %17 = tpu.matmul %14, %16, %cst_29 {dimension_numbers = #tpu.dot_dimension_numbers<[1], [0], [0], [1], [0, 0, 1, 1], [], []>} : vector<16x128xbf16>, vector<128x128xbf16>, vector<16x128xf32> -> vector<16x128xf32>
    %18 = arith.addf %12, %17 : vector<16x128xf32>
    %c0_30 = arith.constant 0 : index
    %c2 = arith.constant 2 : index
    %c0_31 = arith.constant 0 : index
    %19 = vector.load %arg7[%c0_30, %c2, %c0_31] : memref<1x18x128xbf16, #tpu.memory_space<vmem>>, vector<1x16x128xbf16>
    %20 = vector.shape_cast %19 : vector<1x16x128xbf16> to vector<16x128xbf16>
    %c2_32 = arith.constant 2 : index
    %c0_33 = arith.constant 0 : index
    %c0_34 = arith.constant 0 : index
    %21 = vector.load %arg2[%c2_32, %c0_33, %c0_34] : memref<3x128x128xbf16, #tpu.memory_space<vmem>>, vector<1x128x128xbf16>
    %22 = vector.shape_cast %21 : vector<1x128x128xbf16> to vector<128x128xbf16>
    %cst_35 = arith.constant dense<0.000000e+00> : vector<16x128xf32>
    %23 = tpu.matmul %20, %22, %cst_35 {dimension_numbers = #tpu.dot_dimension_numbers<[1], [0], [0], [1], [0, 0, 1, 1], [], []>} : vector<16x128xbf16>, vector<128x128xbf16>, vector<16x128xf32> -> vector<16x128xf32>
    %24 = arith.addf %18, %23 : vector<16x128xf32>
    %c0_36 = arith.constant 0 : index
    %c0_37 = arith.constant 0 : index
    %25 = vector.load %arg3[%c0_36, %c0_37] : memref<1x128xf32, #tpu.memory_space<vmem>>, vector<1x128xf32>
    %26 = vector.broadcast %25 : vector<1x128xf32> to vector<16x128xf32>
    %27 = arith.addf %24, %26 : vector<16x128xf32>
    %cst_38 = arith.constant 0.000000e+00 : f32
    %28 = vector.broadcast %cst_38 : f32 to vector<16x128xf32>
    %29 = arith.maximumf %27, %28 : vector<16x128xf32>
    %30 = vector.shape_cast %29 : vector<16x128xf32> to vector<1x16x128xf32>
    %31 = arith.truncf %30 : vector<1x16x128xf32> to vector<1x16x128xbf16>
    %c0_39 = arith.constant 0 : index
    %c1_40 = arith.constant 1 : index
    %c0_41 = arith.constant 0 : index
    %32 = vector.load %arg8[%c0_39, %c1_40, %c0_41] : memref<1x18x128xbf16, #tpu.memory_space<vmem>>, vector<1x16x128xbf16>
    tpu.vector_store %arg8[%c0_39, %c1_40, %c0_41], %31 {strides = array<i32>} : memref<1x18x128xbf16, #tpu.memory_space<vmem>>, vector<1x16x128xbf16>,
    %c0_42 = arith.constant 0 : index
    %c0_43 = arith.constant 0 : index
    %c0_44 = arith.constant 0 : index
    %33 = vector.load %arg8[%c0_42, %c0_43, %c0_44] : memref<1x18x128xbf16, #tpu.memory_space<vmem>>, vector<1x16x128xbf16>
    %34 = vector.shape_cast %33 : vector<1x16x128xbf16> to vector<16x128xbf16>
    %c0_45 = arith.constant 0 : index
    %c0_46 = arith.constant 0 : index
    %c0_47 = arith.constant 0 : index
    %35 = vector.load %arg4[%c0_45, %c0_46, %c0_47] : memref<3x128x128xbf16, #tpu.memory_space<vmem>>, vector<1x128x128xbf16>
    %36 = vector.shape_cast %35 : vector<1x128x128xbf16> to vector<128x128xbf16>
    %cst_48 = arith.constant dense<0.000000e+00> : vector<16x128xf32>
    %37 = tpu.matmul %34, %36, %cst_48 {dimension_numbers = #tpu.dot_dimension_numbers<[1], [0], [0], [1], [0, 0, 1, 1], [], []>} : vector<16x128xbf16>, vector<128x128xbf16>, vector<16x128xf32> -> vector<16x128xf32>
    %c0_49 = arith.constant 0 : index
    %c1_50 = arith.constant 1 : index
    %c0_51 = arith.constant 0 : index
    %38 = vector.load %arg8[%c0_49, %c1_50, %c0_51] : memref<1x18x128xbf16, #tpu.memory_space<vmem>>, vector<1x16x128xbf16>
    %39 = vector.shape_cast %38 : vector<1x16x128xbf16> to vector<16x128xbf16>
    %c1_52 = arith.constant 1 : index
    %c0_53 = arith.constant 0 : index
    %c0_54 = arith.constant 0 : index
    %40 = vector.load %arg4[%c1_52, %c0_53, %c0_54] : memref<3x128x128xbf16, #tpu.memory_space<vmem>>, vector<1x128x128xbf16>
    %41 = vector.shape_cast %40 : vector<1x128x128xbf16> to vector<128x128xbf16>
    %cst_55 = arith.constant dense<0.000000e+00> : vector<16x128xf32>
    %42 = tpu.matmul %39, %41, %cst_55 {dimension_numbers = #tpu.dot_dimension_numbers<[1], [0], [0], [1], [0, 0, 1, 1], [], []>} : vector<16x128xbf16>, vector<128x128xbf16>, vector<16x128xf32> -> vector<16x128xf32>
    %43 = arith.addf %37, %42 : vector<16x128xf32>
    %c0_56 = arith.constant 0 : index
    %c2_57 = arith.constant 2 : index
    %c0_58 = arith.constant 0 : index
    %44 = vector.load %arg8[%c0_56, %c2_57, %c0_58] : memref<1x18x128xbf16, #tpu.memory_space<vmem>>, vector<1x16x128xbf16>
    %45 = vector.shape_cast %44 : vector<1x16x128xbf16> to vector<16x128xbf16>
    %c2_59 = arith.constant 2 : index
    %c0_60 = arith.constant 0 : index
    %c0_61 = arith.constant 0 : index
    %46 = vector.load %arg4[%c2_59, %c0_60, %c0_61] : memref<3x128x128xbf16, #tpu.memory_space<vmem>>, vector<1x128x128xbf16>
    %47 = vector.shape_cast %46 : vector<1x128x128xbf16> to vector<128x128xbf16>
    %cst_62 = arith.constant dense<0.000000e+00> : vector<16x128xf32>
    %48 = tpu.matmul %45, %47, %cst_62 {dimension_numbers = #tpu.dot_dimension_numbers<[1], [0], [0], [1], [0, 0, 1, 1], [], []>} : vector<16x128xbf16>, vector<128x128xbf16>, vector<16x128xf32> -> vector<16x128xf32>
    %49 = arith.addf %43, %48 : vector<16x128xf32>
    %c0_63 = arith.constant 0 : index
    %c0_64 = arith.constant 0 : index
    %50 = vector.load %arg5[%c0_63, %c0_64] : memref<1x128xf32, #tpu.memory_space<vmem>>, vector<1x128xf32>
    %51 = vector.broadcast %50 : vector<1x128xf32> to vector<16x128xf32>
    %52 = arith.addf %49, %51 : vector<16x128xf32>
    %cst_65 = arith.constant 0.000000e+00 : f32
    %53 = vector.broadcast %cst_65 : f32 to vector<16x128xf32>
    %54 = arith.maximumf %52, %53 : vector<16x128xf32>
    %55 = vector.shape_cast %54 : vector<16x128xf32> to vector<1x16x128xf32>
    %c0_66 = arith.constant 0 : index
    %c0_67 = arith.constant 0 : index
    %c0_68 = arith.constant 0 : index
    %56 = vector.load %arg6[%c0_66, %c0_67, %c0_68] : memref<1x16x128xf32, #tpu.memory_space<vmem>>, vector<1x16x128xf32>
    tpu.vector_store %arg6[%c0_66, %c0_67, %c0_68], %55 {strides = array<i32>} : memref<1x16x128xf32, #tpu.memory_space<vmem>>, vector<1x16x128xf32>,
    return
  }
  func.func @transform_0(%arg0: i32) -> (i32, i32, i32) {
    %c0_i32 = arith.constant 0 : i32
    %c0_i32_0 = arith.constant 0 : i32
    %c0_i32_1 = arith.constant 0 : i32
    return %arg0, %c0_i32, %c0_i32_0 : i32, i32, i32
  }
  func.func @transform_1(%arg0: i32) -> (i32, i32, i32) {
    %c0_i32 = arith.constant 0 : i32
    %c0_i32_0 = arith.constant 0 : i32
    %c0_i32_1 = arith.constant 0 : i32
    %c0_i32_2 = arith.constant 0 : i32
    return %c0_i32, %c0_i32_0, %c0_i32_1 : i32, i32, i32
  }
  func.func @transform_2(%arg0: i32) -> (i32, i32) {
    %c0_i32 = arith.constant 0 : i32
    %c0_i32_0 = arith.constant 0 : i32
    %c0_i32_1 = arith.constant 0 : i32
    return %c0_i32, %c0_i32_0 : i32, i32
  }
  func.func @transform_3(%arg0: i32) -> (i32, i32, i32) {
    %c0_i32 = arith.constant 0 : i32
    %c0_i32_0 = arith.constant 0 : i32
    %c0_i32_1 = arith.constant 0 : i32
    %c0_i32_2 = arith.constant 0 : i32
    return %c0_i32, %c0_i32_0, %c0_i32_1 : i32, i32, i32
  }
  func.func @transform_4(%arg0: i32) -> (i32, i32) {
    %c0_i32 = arith.constant 0 : i32
    %c0_i32_0 = arith.constant 0 : i32
    %c0_i32_1 = arith.constant 0 : i32
    return %c0_i32, %c0_i32_0 : i32, i32
  }
  func.func @transform_5(%arg0: i32) -> (i32, i32, i32) {
    %c0_i32 = arith.constant 0 : i32
    %c0_i32_0 = arith.constant 0 : i32
    %c0_i32_1 = arith.constant 0 : i32
    return %arg0, %c0_i32, %c0_i32_0 : i32, i32, i32
  }
}

</mosaic_0001>

<llo_original>
// kernel: tile.13
$region0: #{tile.13}
  #allocation0 [shape = 's32[1]{0}', space=sflag, size = 0x4, scoped, tag = 'scoped memory for tile.13']
  %s0 = inlined_call_operand.vmem [shape: f32[8], index: 0, kind: input, shape index: {}]
  %s1 = inlined_call_operand.vmem [shape: f32[16,8], index: 1, kind: output, shape index: {}]
  // Predicated region
  $region2: #{tile.13} parent=0 // pred_check
    _
  $region3: #{tile.13} parent=0 // pred_check_branch
    %3 = sbr.rel (0) target = $region5
  $region4: #{tile.13} parent=0 // pred_region
    _
  $region5: #{tile.13} parent=0 // pred_fallthru
    _
  %v4 = vld [vmem:[%s0] ss:$0 sm:$0xff]
  %5 = vst [vmem:[%s1] sm:$0xff] %v4
  %s6 = scalar_lea.vmem %s1, 8
  %7 = vst [vmem:[%s6] sm:$0xff] %v4

// kernel: tile.14
$region0: #{tile.14}
  %s0 = inlined_call_operand.vmem [shape: f32[16,8], index: 0, kind: input, shape index: {}]
  %s1 = inlined_call_operand.vmem [shape: f32[1,128], index: 1, kind: output, shape index: {}]
  $region1: #{tile.14} parent=0
    #allocation0 [shape = 'u8[4096]{0}', space=vmem, size = 0x1000, scoped, tag = 'scoped mem for output reshape']
    %v2 = vld [vmem:[%s0] sm:$0x1]
    %vm3 = vcmask 64512
    %4 = vst.msk [vmem:[#allocation0] sm:$0x1] %vm3, %v2
    %s5 = scalar_lea.vmem %s0, 15
    %v6 = vld [vmem:[%s5] sm:$0x1]
    %7 = vrot.lane.b32.xlu0 %v6, 120
    %v8 = vpop.permute.xlu0 %7
    %vm9 = vcmask 1048512
    %10 = vst.msk [vmem:[#allocation0] sm:$0x1] %vm9, %v8
    %s11 = scalar_lea.vmem %s0, 14
    %v12 = vld [vmem:[%s11] sm:$0x1]
    %13 = vrot.lane.b32.xlu0 %v12, 112
    %v14 = vpop.permute.xlu0 %13
    %vm15 = vcmask 982912
    %16 = vst.msk [vmem:[#allocation0] sm:$0x1] %vm15, %v14
    %s17 = scalar_lea.vmem %s0, 13
    %v18 = vld [vmem:[%s17] sm:$0x1]
    %19 = vrot.lane.b32.xlu0 %v18, 104
    %v20 = vpop.permute.xlu0 %19
    %vm21 = vcmask 917312
    %22 = vst.msk [vmem:[#allocation0] sm:$0x1] %vm21, %v20
    %s23 = scalar_lea.vmem %s0, 12
    %v24 = vld [vmem:[%s23] sm:$0x1]
    %25 = vrot.lane.b32.xlu0 %v24, 96
    %v26 = vpop.permute.xlu0 %25
    %vm27 = vcmask 851712
    %28 = vst.msk [vmem:[#allocation0] sm:$0x1] %vm27, %v26
    %s29 = scalar_lea.vmem %s0, 11
    %v30 = vld [vmem:[%s29] sm:$0x1]
    %31 = vrot.lane.b32.xlu0 %v30, 88
    %v32 = vpop.permute.xlu0 %31
    %vm33 = vcmask 786112
    %34 = vst.msk [vmem:[#allocation0] sm:$0x1] %vm33, %v32
    %s35 = scalar_lea.vmem %s0, 10
    %v36 = vld [vmem:[%s35] sm:$0x1]
    %37 = vrot.lane.b32.xlu0 %v36, 80
    %v38 = vpop.permute.xlu0 %37
    %vm39 = vcmask 720512
    %40 = vst.msk [vmem:[#allocation0] sm:$0x1] %vm39, %v38
    %s41 = scalar_lea.vmem %s0, 9
    %v42 = vld [vmem:[%s41] sm:$0x1]
    %43 = vrot.lane.b32.xlu0 %v42, 72
    %v44 = vpop.permute.xlu0 %43
    %vm45 = vcmask 654912
    %46 = vst.msk [vmem:[#allocation0] sm:$0x1] %vm45, %v44
    %s47 = scalar_lea.vmem %s0, 8
    %v48 = vld [vmem:[%s47] sm:$0x1]
    %49 = vrot.lane.b32.xlu0 %v48, 64
    %v50 = vpop.permute.xlu0 %49
    %vm51 = vcmask 589312
    %52 = vst.msk [vmem:[#allocation0] sm:$0x1] %vm51, %v50
    %s53 = scalar_lea.vmem %s0, 7
    %v54 = vld [vmem:[%s53] sm:$0x1]
    %55 = vrot.lane.b32.xlu0 %v54, 56
    %v56 = vpop.permute.xlu0 %55
    %vm57 = vcmask 523712
    %58 = vst.msk [vmem:[#allocation0] sm:$0x1] %vm57, %v56
    %s59 = scalar_lea.vmem %s0, 6
    %v60 = vld [vmem:[%s59] sm:$0x1]
    %61 = vrot.lane.b32.xlu0 %v60, 48
    %v62 = vpop.permute.xlu0 %61
    %vm63 = vcmask 458112
    %64 = vst.msk [vmem:[#allocation0] sm:$0x1] %vm63, %v62
    %s65 = scalar_lea.vmem %s0, 5
    %v66 = vld [vmem:[%s65] sm:$0x1]
    %67 = vrot.lane.b32.xlu0 %v66, 40
    %v68 = vpop.permute.xlu0 %67
    %vm69 = vcmask 392512
    %70 = vst.msk [vmem:[#allocation0] sm:$0x1] %vm69, %v68
    %s71 = scalar_lea.vmem %s0, 4
    %v72 = vld [vmem:[%s71] sm:$0x1]
    %73 = vrot.lane.b32.xlu0 %v72, 32
    %v74 = vpop.permute.xlu0 %73
    %vm75 = vcmask 326912
    %76 = vst.msk [vmem:[#allocation0] sm:$0x1] %vm75, %v74
    %s77 = scalar_lea.vmem %s0, 3
    %v78 = vld [vmem:[%s77] sm:$0x1]
    %79 = vrot.lane.b32.xlu0 %v78, 24
    %v80 = vpop.permute.xlu0 %79
    %vm81 = vcmask 261312
    %82 = vst.msk [vmem:[#allocation0] sm:$0x1] %vm81, %v80
    %s83 = scalar_lea.vmem %s0, 2
    %v84 = vld [vmem:[%s83] sm:$0x1]
    %85 = vrot.lane.b32.xlu0 %v84, 16
    %v86 = vpop.permute.xlu0 %85
    %vm87 = vcmask 195712
    %88 = vst.msk [vmem:[#allocation0] sm:$0x1] %vm87, %v86
    %s89 = scalar_lea.vmem %s0, 1
    %v90 = vld [vmem:[%s89] sm:$0x1]
    %91 = vrot.lane.b32.xlu0 %v90, 8
    %v92 = vpop.permute.xlu0 %91
    %vm93 = vcmask 130112
    %94 = vst.msk [vmem:[#allocation0] sm:$0x1] %vm93, %v92
    %s96 = sshllo.u32 0, 1
    %v98 = vld [vmem:[#allocation0] sm:%s96]
    %s99 = sshllo.u32 0, 1
    %100 = vst [vmem:[%s1] sm:%s99] %v98

// kernel: inconv_forward.1
$region0: #{inconv_forward.1}
  #allocation0 [shape = 'u32[]', space=smem, size = 0x4, offset = 0x4, fixed_abs, tag = 'smem constant byte address 0x4 - core index']
  #allocation1 [shape = 'u32[144,128]{1,0:T(1,128)}', space=vmem, size = 0x12000, scoped, tag = 'internal scratch']
  #allocation2 [shape = 'bf16[1,18,128]{2,1,0:T(8,128)(2,1)}', space=vmem, size = 0x1800, scoped, tag = 'scratch operand']
  #allocation3 [shape = 'bf16[1,18,128]{2,1,0:T(8,128)(2,1)}', space=vmem, size = 0x1800, scoped, tag = 'scratch operand']
  %s0 = inlined_call_operand.vmem [shape: bf16[2,16,128], index: 0, kind: input, shape index: {}]
  %s1 = inlined_call_operand.vmem [shape: bf16[3,128,128], index: 1, kind: input, shape index: {}]
  %s2 = inlined_call_operand.vmem [shape: f32[1,128], index: 2, kind: input, shape index: {}]
  %s3 = inlined_call_operand.vmem [shape: bf16[3,128,128], index: 3, kind: input, shape index: {}]
  %s4 = inlined_call_operand.vmem [shape: f32[1,128], index: 4, kind: input, shape index: {}]
  %s5 = inlined_call_operand.vmem [shape: f32[2,16,128], index: 5, kind: output, shape index: {}]
  %s6 = sld [smem:[#allocation0]]
  $region53: #{inconv_forward.1} parent=0
    _
  %s8 = ssub.s32 1, %s6
  %s9 = scalar_select 0, %s8, %s6
  loop: start=0, step=1, limit=4
  $region2: #{inconv_forward.1} parent=0 // loop_pre_header
    _
  $region3: #{inconv_forward.1} parent=0 // loop_header
    %s11 = sphi 0, %s15
    %p12 = scmp.ge.s32.totalorder %s11, 4
    %s21 = sphi 0, %s23
    %s24 = sphi 0, %s21
    %s25 = sphi 0, %s24
    %s41 = sphi 0, %s25
    %s45 = sphi 0, %s45
    %s47 = sphi 0, %s45
    %s48 = sphi 0, %s47
    %s62 = sphi 0, %s48
    %s66 = sphi 0, %s66
    %s68 = sphi 0, %s66
    %s69 = sphi 0, %s68
    %s83 = sphi 0, %s69
    %s87 = sphi 0, %s87
    %s89 = sphi 0, %s87
    %s90 = sphi 0, %s89
    %s104 = sphi 0, %s90
    %s108 = sphi 0, %s108
    %s110 = sphi 0, %s108
    %s111 = sphi 0, %s110
    %s125 = sphi 0, %s111
    %s131 = sphi 0, %s133
    %s134 = sphi 0, %s131
    %s135 = sphi 0, %s134
    %s151 = sphi 0, %s135
  $region4: #{inconv_forward.1} parent=0 // loop_header_branch
    %14 = sbr.rel (%p12) target = $region8
  $region5: #{inconv_forward.1} parent=0 // loop_body
    %s16 = ssub.s32 %s11, 1
    %s17 = ssub.s32 %s11, 2
    %s18 = sadd.s32 %s11, 1
    %s19 = ssub.s32 %s11, %s18
    %p20 = scmp.eq.s32.totalorder %s19, 0
    %s22 = sadd.s32 %s21, 1
    %s23 = scalar_select %p20, %s21, %s22
    %p26 = pneg %p20
    %p27 = scmp.eq.s32.totalorder %s11, 1
    %p28 = por %p26, %p27
    %p29 = scmp.ne.s32.totalorder %s21, %s24
    %p30 = scmp.eq.s32.totalorder %s11, 0
    %p31 = por %p29, %p30
    %p32 = scmp.ne.s32.totalorder %s21, %s24
    %p33 = scmp.eq.s32.totalorder %s16, 1
    %p34 = por %p32, %p33
    %p35 = scmp.ne.s32.totalorder %s24, %s25
    %p36 = scmp.eq.s32.totalorder %s16, 0
    %p37 = por %p35, %p36
    %p38 = scmp.ne.s32.totalorder %s24, %s25
    %p39 = scmp.eq.s32.totalorder %s17, 1
    %p40 = por %p38, %p39
    %p42 = scmp.ne.s32.totalorder %s25, %s41
    %p43 = scmp.eq.s32.totalorder %s17, 0
    %p44 = por %p42, %p43
    %s46 = sadd.s32 %s45, 1
    %p49 = scmp.eq.s32.totalorder %s11, 1
    %p50 = scmp.ne.s32.totalorder %s45, %s47
    %p51 = scmp.eq.s32.totalorder %s11, 0
    %p52 = por %p50, %p51
    %p53 = scmp.ne.s32.totalorder %s45, %s47
    %p54 = scmp.eq.s32.totalorder %s16, 1
    %p55 = por %p53, %p54
    %p56 = scmp.ne.s32.totalorder %s47, %s48
    %p57 = scmp.eq.s32.totalorder %s16, 0
    %p58 = por %p56, %p57
    %p59 = scmp.ne.s32.totalorder %s47, %s48
    %p60 = scmp.eq.s32.totalorder %s17, 1
    %p61 = por %p59, %p60
    %p63 = scmp.ne.s32.totalorder %s48, %s62
    %p64 = scmp.eq.s32.totalorder %s17, 0
    %p65 = por %p63, %p64
    %s67 = sadd.s32 %s66, 1
    %p70 = scmp.eq.s32.totalorder %s11, 1
    %p71 = scmp.ne.s32.totalorder %s66, %s68
    %p72 = scmp.eq.s32.totalorder %s11, 0
    %p73 = por %p71, %p72
    %p74 = scmp.ne.s32.totalorder %s66, %s68
    %p75 = scmp.eq.s32.totalorder %s16, 1
    %p76 = por %p74, %p75
    %p77 = scmp.ne.s32.totalorder %s68, %s69
    %p78 = scmp.eq.s32.totalorder %s16, 0
    %p79 = por %p77, %p78
    %p80 = scmp.ne.s32.totalorder %s68, %s69
    %p81 = scmp.eq.s32.totalorder %s17, 1
    %p82 = por %p80, %p81
    %p84 = scmp.ne.s32.totalorder %s69, %s83
    %p85 = scmp.eq.s32.totalorder %s17, 0
    %p86 = por %p84, %p85
    %s88 = sadd.s32 %s87, 1
    %p91 = scmp.eq.s32.totalorder %s11, 1
    %p92 = scmp.ne.s32.totalorder %s87, %s89
    %p93 = scmp.eq.s32.totalorder %s11, 0
    %p94 = por %p92, %p93
    %p95 = scmp.ne.s32.totalorder %s87, %s89
    %p96 = scmp.eq.s32.totalorder %s16, 1
    %p97 = por %p95, %p96
    %p98 = scmp.ne.s32.totalorder %s89, %s90
    %p99 = scmp.eq.s32.totalorder %s16, 0
    %p100 = por %p98, %p99
    %p101 = scmp.ne.s32.totalorder %s89, %s90
    %p102 = scmp.eq.s32.totalorder %s17, 1
    %p103 = por %p101, %p102
    %p105 = scmp.ne.s32.totalorder %s90, %s104
    %p106 = scmp.eq.s32.totalorder %s17, 0
    %p107 = por %p105, %p106
    %s109 = sadd.s32 %s108, 1
    %p112 = scmp.eq.s32.totalorder %s11, 1
    %p113 = scmp.ne.s32.totalorder %s108, %s110
    %p114 = scmp.eq.s32.totalorder %s11, 0
    %p115 = por %p113, %p114
    %p116 = scmp.ne.s32.totalorder %s108, %s110
    %p117 = scmp.eq.s32.totalorder %s16, 1
    %p118 = por %p116, %p117
    %p119 = scmp.ne.s32.totalorder %s110, %s111
    %p120 = scmp.eq.s32.totalorder %s16, 0
    %p121 = por %p119, %p120
    %p122 = scmp.ne.s32.totalorder %s110, %s111
    %p123 = scmp.eq.s32.totalorder %s17, 1
    %p124 = por %p122, %p123
    %p126 = scmp.ne.s32.totalorder %s111, %s125
    %p127 = scmp.eq.s32.totalorder %s17, 0
    %p128 = por %p126, %p127
    %s129 = ssub.s32 %s11, %s18
    %p130 = scmp.eq.s32.totalorder %s129, 0
    %s132 = sadd.s32 %s131, 1
    %s133 = scalar_select %p130, %s131, %s132
    %p136 = pneg %p130
    %p137 = scmp.eq.s32.totalorder %s11, 1
    %p138 = por %p136, %p137
    %p139 = scmp.ne.s32.totalorder %s131, %s134
    %p140 = scmp.eq.s32.totalorder %s11, 0
    %p141 = por %p139, %p140
    %p142 = scmp.ne.s32.totalorder %s131, %s134
    %p143 = scmp.eq.s32.totalorder %s16, 1
    %p144 = por %p142, %p143
    %p145 = scmp.ne.s32.totalorder %s134, %s135
    %p146 = scmp.eq.s32.totalorder %s16, 0
    %p147 = por %p145, %p146
    %p148 = scmp.ne.s32.totalorder %s134, %s135
    %p149 = scmp.eq.s32.totalorder %s17, 1
    %p150 = por %p148, %p149
    %p152 = scmp.ne.s32.totalorder %s135, %s151
    %p153 = scmp.eq.s32.totalorder %s17, 0
    %p154 = por %p152, %p153
    %p155 = scmp.le.s32.totalorder 1, %s11
    %p156 = scmp.lt.s32.totalorder %s11, 3
    %p157 = pnand %p155, %p156
    %p158 = pneg %p157
    // Predicated region
    $region9: #{inconv_forward.1} parent=5 // pred_check
      _
    $region10: #{inconv_forward.1} parent=5 // pred_check_branch
      %160 = sbr.rel (%p157) target = $region12
    $region11: #{inconv_forward.1} parent=5 // pred_region
      %s161 = ssub.s32 %s11, 1
      // Predicated region
      $region13: #{inconv_forward.1} parent=11 // pred_check
        %p162 = pneg %p58
      $region14: #{inconv_forward.1} parent=11 // pred_check_branch
        %164 = sbr.rel (%p162) target = $region16
      $region15: #{inconv_forward.1} parent=11 // pred_region
        _
      $region16: #{inconv_forward.1} parent=11 // pred_fallthru
        _
      // Predicated region
      $region17: #{inconv_forward.1} parent=11 // pred_check
        %p165 = pneg %p79
      $region18: #{inconv_forward.1} parent=11 // pred_check_branch
        %167 = sbr.rel (%p165) target = $region20
      $region19: #{inconv_forward.1} parent=11 // pred_region
        _
      $region20: #{inconv_forward.1} parent=11 // pred_fallthru
        _
      // Predicated region
      $region21: #{inconv_forward.1} parent=11 // pred_check
        %p168 = pneg %p100
      $region22: #{inconv_forward.1} parent=11 // pred_check_branch
        %170 = sbr.rel (%p168) target = $region24
      $region23: #{inconv_forward.1} parent=11 // pred_region
        _
      $region24: #{inconv_forward.1} parent=11 // pred_fallthru
        _
      // Predicated region
      $region25: #{inconv_forward.1} parent=11 // pred_check
        %p171 = pneg %p121
      $region26: #{inconv_forward.1} parent=11 // pred_check_branch
        %173 = sbr.rel (%p171) target = $region28
      $region27: #{inconv_forward.1} parent=11 // pred_region
        _
      $region28: #{inconv_forward.1} parent=11 // pred_fallthru
        _
    $region12: #{inconv_forward.1} parent=5 // pred_fallthru
      _
    %p174 = scmp.lt.s32.totalorder %s11, 2
    // Predicated region
    $region29: #{inconv_forward.1} parent=5 // pred_check
      %p175 = pneg %p174
    $region30: #{inconv_forward.1} parent=5 // pred_check_branch
      %177 = sbr.rel (%p175) target = $region32
    $region31: #{inconv_forward.1} parent=5 // pred_region
      // Predicated region
      $region33: #{inconv_forward.1} parent=31 // pred_check
        %p178 = pneg %p31
      $region34: #{inconv_forward.1} parent=31 // pred_check_branch
        %180 = sbr.rel (%p178) target = $region36
      $region35: #{inconv_forward.1} parent=31 // pred_region
        %p181 = scmp.lt.s32.totalorder %s11, 1
        %s182 = scalar_select %p181, %s11, 1
        %s183 = smul.addr %s182, 2
        %s184 = smul.addr %s183, 4
        %s185 = scalar_lea.vmem %s0, %s184
      $region36: #{inconv_forward.1} parent=31 // pred_fallthru
        _
    $region32: #{inconv_forward.1} parent=5 // pred_fallthru
      _
    %p186 = scmp.le.s32.totalorder 1, %s11
    %p187 = scmp.lt.s32.totalorder %s11, 3
    %p188 = pnand %p186, %p187
    %p189 = pneg %p188
    // Predicated region
    $region37: #{inconv_forward.1} parent=5 // pred_check
      _
    $region38: #{inconv_forward.1} parent=5 // pred_check_branch
      %191 = sbr.rel (%p188) target = $region40
    $region39: #{inconv_forward.1} parent=5 // pred_region
      %s192 = ssub.s32 %s11, 1
      %p193 = scmp.lt.s32.totalorder %s16, 1
      %s194 = scalar_select %p193, %s16, 1
      %s195 = smul.addr %s194, 2
      %s196 = smul.addr %s195, 4
      %s197 = scalar_lea.vmem %s0, %s196
      %p198 = pneg %p37
      %p199 = pneg %p34
      %p200 = pneg %p58
      %p201 = pneg %p55
      %p202 = pneg %p79
      %p203 = pneg %p76
      %p204 = pneg %p100
      %p205 = pneg %p97
      %p206 = pneg %p121
      %p207 = pneg %p118
      %p208 = pneg %p147
      %p209 = pneg %p144
      %p210 = scmp.lt.s32.totalorder %s16, 1
      %s211 = scalar_select %p210, %s16, 1
      %s212 = smul.addr %s211, 2
      %s213 = smul.addr %s212, 8
      %s214 = scalar_lea.vmem %s5, %s213
      %p215 = scmp.lt.s32.totalorder %s16, 1
      %s216 = scalar_select %p215, %s16, 1
      %s217 = smul.addr %s216, 2
      %s218 = smul.addr %s217, 4
      %s219 = scalar_lea.vmem %s0, %s218
      %p220 = scmp.lt.s32.totalorder %s16, 1
      %s221 = scalar_select %p220, %s16, 1
      %s222 = smul.addr %s221, 2
      %s223 = smul.addr %s222, 8
      %s224 = scalar_lea.vmem %s5, %s223
      %vm226 = vcmask 1040384
      %vm227 = vsmask.f32 256
      %vm228 = vmand %vm226, %vm227
      %v229 = vld [vmem:[#allocation2] sm:$0x1]
      %v230 = vsel %vm228, 0, %v229
      %231 = vst [vmem:[#allocation2] sm:$0x1] %v230
      %vm232 = vsmask.f32 7938
      %vm233 = vmand %vm226, %vm232
      %v234 = vld [vmem:[#allocation2 + $0x8] sm:$0x1]
      %v235 = vsel %vm233, 0, %v234
      %236 = vst [vmem:[#allocation2 + $0x8] sm:$0x1] %v235
      %v237 = vld [vmem:[#allocation3] sm:$0x1]
      %v238 = vsel %vm228, 0, %v237
      %239 = vst [vmem:[#allocation3] sm:$0x1] %v238
      %v240 = vld [vmem:[#allocation3 + $0x8] sm:$0x1]
      %v241 = vsel %vm233, 0, %v240
      %242 = vst [vmem:[#allocation3 + $0x8] sm:$0x1] %v241
      %v243 = vld [vmem:[%s219] sm:$0xf]
      %v244 = vld [vmem:[%s219 + $0x4] sm:$0xf]
      %vm245 = vsmask.f32 4368
      %vm246 = vmor %vm227, %vm245
      %v248 = vshrl.u32 %v243, 16
      %v250 = vrot.slane %v248, 7
      %v251 = vshll.u32 %v243, 16
      %v253 = vor.u32 %v250, %v251
      %v254 = vrot.slane %v250, 4
      %v256 = vshrl.u32 %v244, 16
      %v258 = vrot.slane %v256, 7
      %v259 = vshll.u32 %v244, 16
      %v261 = vor.u32 %v258, %v259
      %v262 = vsel %vm246, %v254, %v261
      %v263 = vrot.slane %v258, 4
      %vm267 = vcmask 1043456
      %vm268 = vmand %vm267, %vm232
      %v269 = vld [vmem:[#allocation2] sm:$0xf]
      %v270 = vsel %vm268, %v253, %v269
      %271 = vst [vmem:[#allocation2] sm:$0xf] %v270
      %272 = vst [vmem:[#allocation2 + $0x4] sm:$0xf] %v262
      %v273 = vld [vmem:[#allocation2 + $0x8] sm:$0x1]
      %v274 = vsel %vm228, %v263, %v273
      %275 = vst [vmem:[#allocation2 + $0x8] sm:$0x1] %v274
      %v276 = vld [vmem:[#allocation2] sm:$0xf]
      %v277 = vld [vmem:[#allocation2 + $0x4] sm:$0xf]
      %v278 = vld [vmem:[%s1] sm:$0xf]
      %v279 = vld [vmem:[%s1 + $0x4] sm:$0xf]
      %v280 = vld [vmem:[%s1 + $0x8] sm:$0xf]
      %v281 = vld [vmem:[%s1 + $0xc] sm:$0xf]
      %v282 = vld [vmem:[%s1 + $0x10] sm:$0xf]
      %v283 = vld [vmem:[%s1 + $0x14] sm:$0xf]
      %v284 = vld [vmem:[%s1 + $0x18] sm:$0xf]
      %v285 = vld [vmem:[%s1 + $0x1c] sm:$0xf]
      %v286 = vld [vmem:[%s1 + $0x20] sm:$0xf]
      %v287 = vld [vmem:[%s1 + $0x24] sm:$0xf]
      %v288 = vld [vmem:[%s1 + $0x28] sm:$0xf]
      %v289 = vld [vmem:[%s1 + $0x2c] sm:$0xf]
      %v290 = vld [vmem:[%s1 + $0x30] sm:$0xf]
      %v291 = vld [vmem:[%s1 + $0x34] sm:$0xf]
      %v292 = vld [vmem:[%s1 + $0x38] sm:$0xf]
      %v293 = vld [vmem:[%s1 + $0x3c] sm:$0xf]
      %v294 = vld [vmem:[#allocation2 + $0x8] sm:$0x1]
      %s295 = scalar_lea.vmem %s1, 64
      %v296 = vld [vmem:[%s295] sm:$0xf]
      %v297 = vld [vmem:[%s295 + $0x4] sm:$0xf]
      %v298 = vld [vmem:[%s295 + $0x8] sm:$0xf]
      %v299 = vld [vmem:[%s295 + $0xc] sm:$0xf]
      %v300 = vld [vmem:[%s295 + $0x10] sm:$0xf]
      %v301 = vld [vmem:[%s295 + $0x14] sm:$0xf]
      %v302 = vld [vmem:[%s295 + $0x18] sm:$0xf]
      %v303 = vld [vmem:[%s295 + $0x1c] sm:$0xf]
      %v304 = vld [vmem:[%s295 + $0x20] sm:$0xf]
      %v305 = vld [vmem:[%s295 + $0x24] sm:$0xf]
      %v306 = vld [vmem:[%s295 + $0x28] sm:$0xf]
      %v307 = vld [vmem:[%s295 + $0x2c] sm:$0xf]
      %v308 = vld [vmem:[%s295 + $0x30] sm:$0xf]
      %v309 = vld [vmem:[%s295 + $0x34] sm:$0xf]
      %v310 = vld [vmem:[%s295 + $0x38] sm:$0xf]
      %v311 = vld [vmem:[%s295 + $0x3c] sm:$0xf]
      %v315 = vunpack.c.l.b16 %v276
      %v316 = vunpack.c.l.b16 %v277
      %v317 = vunpack.c.l.b16 %v294
      %v318 = vpack.c.b16 %v316, %v315
      %v319 = vpack.c.b16 %v317, %v317
      %vm320 = vsmask.f32 7424
      %v322 = vshrl.u32 %v318, 16
      %v324 = vshll.u32 %v318, 16
      %v326 = vrot.slane %v324, 1
      %v327 = vor.u32 %v322, %v326
      %v329 = vshll.u32 %v319, 16
      %v331 = vrot.slane %v329, 1
      %v332 = vsel %vm320, %v327, %v331
      %v350 = vunpack.c.l.b16 %v296
      %v351 = vunpack.c.l.b16 %v297
      %v352 = vunpack.c.l.b16 %v298
      %v353 = vunpack.c.l.b16 %v299
      %v354 = vunpack.c.l.b16 %v300
      %v355 = vunpack.c.l.b16 %v301
      %v356 = vunpack.c.l.b16 %v302
      %v357 = vunpack.c.l.b16 %v303
      %v358 = vunpack.c.l.b16 %v304
      %v359 = vunpack.c.l.b16 %v305
      %v360 = vunpack.c.l.b16 %v306
      %v361 = vunpack.c.l.b16 %v307
      %v362 = vunpack.c.l.b16 %v308
      %v363 = vunpack.c.l.b16 %v309
      %v364 = vunpack.c.l.b16 %v310
      %v365 = vunpack.c.l.b16 %v311
      %v366 = vpack.c.b16 %v351, %v350
      %v367 = vpack.c.b16 %v353, %v352
      %v368 = vpack.c.b16 %v355, %v354
      %v369 = vpack.c.b16 %v357, %v356
      %v370 = vpack.c.b16 %v359, %v358
      %v371 = vpack.c.b16 %v361, %v360
      %v372 = vpack.c.b16 %v363, %v362
      %v373 = vpack.c.b16 %v365, %v364
      %382 = vmatprep.subr.bf16.mxu0 0
      %383 = vmatpush1.bf16.msra.mxu0 %v366
      %384 = vmatprep.subr.bf16.mxu0 0
      %385 = vmatpush1.bf16.msra.mxu0 %v367
      %386 = vmatprep.subr.bf16.mxu0 0
      %387 = vmatpush1.bf16.msra.mxu0 %v368
      %388 = vmatprep.subr.bf16.mxu0 0
      %389 = vmatpush1.bf16.msra.mxu0 %v369
      %390 = vmatprep.subr.bf16.mxu0 0
      %391 = vmatpush1.bf16.msra.mxu0 %v370
      %392 = vmatprep.subr.bf16.mxu0 0
      %393 = vmatpush1.bf16.msra.mxu0 %v371
      %394 = vmatprep.subr.bf16.mxu0 0
      %395 = vmatpush1.bf16.msra.mxu0 %v372
      %396 = vmatprep.subr.bf16.mxu0 0
      %397 = vmatpush1.bf16.msra.mxu0 %v373
      %398 = vmatprep.subr.bf16.mxu0 0
      %399 = vmatpush1.bf16.msra.mxu0 0
      %400 = vmatprep.subr.bf16.mxu0 0
      %401 = vmatpush1.bf16.msra.mxu0 0
      %402 = vmatprep.subr.bf16.mxu0 0
      %403 = vmatpush1.bf16.msra.mxu0 0
      %404 = vmatprep.subr.bf16.mxu0 0
      %405 = vmatpush1.bf16.msra.mxu0 0
      %406 = vmatprep.subr.bf16.mxu0 0
      %407 = vmatpush1.bf16.msra.mxu0 0
      %408 = vmatprep.subr.bf16.mxu0 0
      %409 = vmatpush1.bf16.msra.mxu0 0
      %410 = vmatprep.subr.bf16.mxu0 0
      %411 = vmatpush1.bf16.msra.mxu0 0
      %412 = vmatprep.subr.bf16.mxu0 0
      %413 = vmatpush1.bf16.msra.mxu0 0
      %414 = vmatprep.mubr.bf16.mxu0 0
      %415 = vmatmul.mubr.bf16.gmra.mrb[0].mxu0 %v332
      %v416 = vpop.f32.mrb[0].mxu0
      %v417 = vadd.f32 0.0, %v416
      %v418 = vpop.f32.mrb[0].mxu0
      %v419 = vpop.f32.mrb[0].mxu0
      %v420 = vadd.f32 0.0, %v419
      %v421 = vpop.f32.mrb[0].mxu0
      %422 = vdwg.mxu0
      %v440 = vunpack.c.l.b16 %v278
      %v441 = vunpack.c.l.b16 %v279
      %v442 = vunpack.c.l.b16 %v280
      %v443 = vunpack.c.l.b16 %v281
      %v444 = vunpack.c.l.b16 %v282
      %v445 = vunpack.c.l.b16 %v283
      %v446 = vunpack.c.l.b16 %v284
      %v447 = vunpack.c.l.b16 %v285
      %v448 = vunpack.c.l.b16 %v286
      %v449 = vunpack.c.l.b16 %v287
      %v450 = vunpack.c.l.b16 %v288
      %v451 = vunpack.c.l.b16 %v289
      %v452 = vunpack.c.l.b16 %v290
      %v453 = vunpack.c.l.b16 %v291
      %v454 = vunpack.c.l.b16 %v292
      %v455 = vunpack.c.l.b16 %v293
      %v456 = vpack.c.b16 %v441, %v440
      %v457 = vpack.c.b16 %v443, %v442
      %v458 = vpack.c.b16 %v445, %v444
      %v459 = vpack.c.b16 %v447, %v446
      %v460 = vpack.c.b16 %v449, %v448
      %v461 = vpack.c.b16 %v451, %v450
      %v462 = vpack.c.b16 %v453, %v452
      %v463 = vpack.c.b16 %v455, %v454
      %472 = vmatprep.subr.bf16.mxu0 0
      %473 = vmatpush1.bf16.msra.mxu0 %v456
      %474 = vmatprep.subr.bf16.mxu0 0
      %475 = vmatpush1.bf16.msra.mxu0 %v457
      %476 = vmatprep.subr.bf16.mxu0 0
      %477 = vmatpush1.bf16.msra.mxu0 %v458
      %478 = vmatprep.subr.bf16.mxu0 0
      %479 = vmatpush1.bf16.msra.mxu0 %v459
      %480 = vmatprep.subr.bf16.mxu0 0
      %481 = vmatpush1.bf16.msra.mxu0 %v460
      %482 = vmatprep.subr.bf16.mxu0 0
      %483 = vmatpush1.bf16.msra.mxu0 %v461
      %484 = vmatprep.subr.bf16.mxu0 0
      %485 = vmatpush1.bf16.msra.mxu0 %v462
      %486 = vmatprep.subr.bf16.mxu0 0
      %487 = vmatpush1.bf16.msra.mxu0 %v463
      %488 = vmatprep.subr.bf16.mxu0 0
      %489 = vmatpush1.bf16.msra.mxu0 0
      %490 = vmatprep.subr.bf16.mxu0 0
      %491 = vmatpush1.bf16.msra.mxu0 0
      %492 = vmatprep.subr.bf16.mxu0 0
      %493 = vmatpush1.bf16.msra.mxu0 0
      %494 = vmatprep.subr.bf16.mxu0 0
      %495 = vmatpush1.bf16.msra.mxu0 0
      %496 = vmatprep.subr.bf16.mxu0 0
      %497 = vmatpush1.bf16.msra.mxu0 0
      %498 = vmatprep.subr.bf16.mxu0 0
      %499 = vmatpush1.bf16.msra.mxu0 0
      %500 = vmatprep.subr.bf16.mxu0 0
      %501 = vmatpush1.bf16.msra.mxu0 0
      %502 = vmatprep.subr.bf16.mxu0 0
      %503 = vmatpush1.bf16.msra.mxu0 0
      %504 = vmatprep.mubr.bf16.mxu0 0
      %505 = vmatmul.mubr.bf16.gmra.mrb[0].mxu0 %v318
      %v506 = vpop.f32.mrb[0].mxu0
      %v507 = vadd.f32 %v417, %v506
      %v508 = vpop.f32.mrb[0].mxu0
      %v509 = vpop.f32.mrb[0].mxu0
      %v510 = vadd.f32 %v420, %v509
      %v511 = vpop.f32.mrb[0].mxu0
      %512 = vdwg.mxu0
      %v513 = vld [vmem:[#allocation2] sm:$0xe]
      %s514 = scalar_lea.vmem %s1, 128
      %v515 = vld [vmem:[%s514] sm:$0xf]
      %v516 = vld [vmem:[%s514 + $0x4] sm:$0xf]
      %v517 = vld [vmem:[%s514 + $0x8] sm:$0xf]
      %v518 = vld [vmem:[%s514 + $0xc] sm:$0xf]
      %v519 = vld [vmem:[%s514 + $0x10] sm:$0xf]
      %v520 = vld [vmem:[%s514 + $0x14] sm:$0xf]
      %v521 = vld [vmem:[%s514 + $0x18] sm:$0xf]
      %v522 = vld [vmem:[%s514 + $0x1c] sm:$0xf]
      %v523 = vld [vmem:[%s514 + $0x20] sm:$0xf]
      %v524 = vld [vmem:[%s514 + $0x24] sm:$0xf]
      %v525 = vld [vmem:[%s514 + $0x28] sm:$0xf]
      %v526 = vld [vmem:[%s514 + $0x2c] sm:$0xf]
      %v527 = vld [vmem:[%s514 + $0x30] sm:$0xf]
      %v528 = vld [vmem:[%s514 + $0x34] sm:$0xf]
      %v529 = vld [vmem:[%s514 + $0x38] sm:$0xf]
      %v530 = vld [vmem:[%s514 + $0x3c] sm:$0xf]
      %v532 = vunpack.c.l.b16 %v513
      %v533 = vpack.c.b16 %v316, %v532
      %vm534 = vcmask 1046528
      %v535 = vrot.slane %v533, 1
      %v536 = vrot.slane %v319, 1
      %v537 = vsel %vm534, %v535, %v536
      %v555 = vunpack.c.l.b16 %v515
      %v556 = vunpack.c.l.b16 %v516
      %v557 = vunpack.c.l.b16 %v517
      %v558 = vunpack.c.l.b16 %v518
      %v559 = vunpack.c.l.b16 %v519
      %v560 = vunpack.c.l.b16 %v520
      %v561 = vunpack.c.l.b16 %v521
      %v562 = vunpack.c.l.b16 %v522
      %v563 = vunpack.c.l.b16 %v523
      %v564 = vunpack.c.l.b16 %v524
      %v565 = vunpack.c.l.b16 %v525
      %v566 = vunpack.c.l.b16 %v526
      %v567 = vunpack.c.l.b16 %v527
      %v568 = vunpack.c.l.b16 %v528
      %v569 = vunpack.c.l.b16 %v529
      %v570 = vunpack.c.l.b16 %v530
      %v571 = vpack.c.b16 %v556, %v555
      %v572 = vpack.c.b16 %v558, %v557
      %v573 = vpack.c.b16 %v560, %v559
      %v574 = vpack.c.b16 %v562, %v561
      %v575 = vpack.c.b16 %v564, %v563
      %v576 = vpack.c.b16 %v566, %v565
      %v577 = vpack.c.b16 %v568, %v567
      %v578 = vpack.c.b16 %v570, %v569
      %587 = vmatprep.subr.bf16.mxu0 0
      %588 = vmatpush1.bf16.msra.mxu0 %v571
      %589 = vmatprep.subr.bf16.mxu0 0
      %590 = vmatpush1.bf16.msra.mxu0 %v572
      %591 = vmatprep.subr.bf16.mxu0 0
      %592 = vmatpush1.bf16.msra.mxu0 %v573
      %593 = vmatprep.subr.bf16.mxu0 0
      %594 = vmatpush1.bf16.msra.mxu0 %v574
      %595 = vmatprep.subr.bf16.mxu0 0
      %596 = vmatpush1.bf16.msra.mxu0 %v575
      %597 = vmatprep.subr.bf16.mxu0 0
      %598 = vmatpush1.bf16.msra.mxu0 %v576
      %599 = vmatprep.subr.bf16.mxu0 0
      %600 = vmatpush1.bf16.msra.mxu0 %v577
      %601 = vmatprep.subr.bf16.mxu0 0
      %602 = vmatpush1.bf16.msra.mxu0 %v578
      %603 = vmatprep.subr.bf16.mxu0 0
      %604 = vmatpush1.bf16.msra.mxu0 0
      %605 = vmatprep.subr.bf16.mxu0 0
      %606 = vmatpush1.bf16.msra.mxu0 0
      %607 = vmatprep.subr.bf16.mxu0 0
      %608 = vmatpush1.bf16.msra.mxu0 0
      %609 = vmatprep.subr.bf16.mxu0 0
      %610 = vmatpush1.bf16.msra.mxu0 0
      %611 = vmatprep.subr.bf16.mxu0 0
      %612 = vmatpush1.bf16.msra.mxu0 0
      %613 = vmatprep.subr.bf16.mxu0 0
      %614 = vmatpush1.bf16.msra.mxu0 0
      %615 = vmatprep.subr.bf16.mxu0 0
      %616 = vmatpush1.bf16.msra.mxu0 0
      %617 = vmatprep.subr.bf16.mxu0 0
      %618 = vmatpush1.bf16.msra.mxu0 0
      %619 = vmatprep.mubr.bf16.mxu0 0
      %620 = vmatmul.mubr.bf16.gmra.mrb[0].mxu0 %v537
      %v621 = vpop.f32.mrb[0].mxu0
      %v622 = vadd.f32 0.0, %v621
      %v623 = vpop.f32.mrb[0].mxu0
      %v624 = vpop.f32.mrb[0].mxu0
      %v625 = vadd.f32 0.0, %v624
      %v626 = vpop.f32.mrb[0].mxu0
      %627 = vdwg.mxu0
      %v628 = vadd.f32 %v507, %v622
      %v629 = vadd.f32 %v510, %v625
      %v630 = vld [vmem:[%s2] sm:$0x1]
      %v632 = vlaneseq
      %v633 = vshrl.u32 %v632, 7
      %v634 = vsub.s32 0, %v633
      %v635 = vrot.slane %v630, %v634
      %v637 = vadd.f32 %v628, %v635
      %v638 = vadd.f32 %v629, %v635
      %v639 = vmax.f32 %v637, 0.0
      %v640 = vmax.f32 %v638, 0.0
      %v641 = vpack.c.bf16 %v640, %v639
      %v643 = vunpack.c.l.b16 %v641
      %v644 = vunpack.c.h.b16 %v641
      %v645 = vpack.c.b16 %v643, %v643
      %v646 = vpack.c.b16 %v644, %v644
      %v648 = vshrl.u32 %v645, 16
      %v650 = vrot.slane %v648, 7
      %v651 = vshll.u32 %v645, 16
      %v653 = vor.u32 %v650, %v651
      %v654 = vrot.slane %v650, 4
      %v656 = vshrl.u32 %v646, 16
      %v658 = vrot.slane %v656, 7
      %v659 = vshll.u32 %v646, 16
      %v661 = vor.u32 %v658, %v659
      %v662 = vsel %vm246, %v654, %v661
      %v663 = vrot.slane %v658, 4
      %v667 = vld [vmem:[#allocation3] sm:$0xf]
      %v668 = vsel %vm268, %v653, %v667
      %669 = vst [vmem:[#allocation3] sm:$0xf] %v668
      %670 = vst [vmem:[#allocation3 + $0x4] sm:$0xf] %v662
      %v671 = vld [vmem:[#allocation3 + $0x8] sm:$0x1]
      %v672 = vsel %vm228, %v663, %v671
      %673 = vst [vmem:[#allocation3 + $0x8] sm:$0x1] %v672
      %v674 = vld [vmem:[#allocation3] sm:$0xf]
      %v675 = vld [vmem:[#allocation3 + $0x4] sm:$0xf]
      %v676 = vld [vmem:[%s3] sm:$0xf]
      %v677 = vld [vmem:[%s3 + $0x4] sm:$0xf]
      %v678 = vld [vmem:[%s3 + $0x8] sm:$0xf]
      %v679 = vld [vmem:[%s3 + $0xc] sm:$0xf]
      %v680 = vld [vmem:[%s3 + $0x10] sm:$0xf]
      %v681 = vld [vmem:[%s3 + $0x14] sm:$0xf]
      %v682 = vld [vmem:[%s3 + $0x18] sm:$0xf]
      %v683 = vld [vmem:[%s3 + $0x1c] sm:$0xf]
      %v684 = vld [vmem:[%s3 + $0x20] sm:$0xf]
      %v685 = vld [vmem:[%s3 + $0x24] sm:$0xf]
      %v686 = vld [vmem:[%s3 + $0x28] sm:$0xf]
      %v687 = vld [vmem:[%s3 + $0x2c] sm:$0xf]
      %v688 = vld [vmem:[%s3 + $0x30] sm:$0xf]
      %v689 = vld [vmem:[%s3 + $0x34] sm:$0xf]
      %v690 = vld [vmem:[%s3 + $0x38] sm:$0xf]
      %v691 = vld [vmem:[%s3 + $0x3c] sm:$0xf]
      %v692 = vld [vmem:[#allocation3 + $0x8] sm:$0x1]
      %s693 = scalar_lea.vmem %s3, 64
      %v694 = vld [vmem:[%s693] sm:$0xf]
      %v695 = vld [vmem:[%s693 + $0x4] sm:$0xf]
      %v696 = vld [vmem:[%s693 + $0x8] sm:$0xf]
      %v697 = vld [vmem:[%s693 + $0xc] sm:$0xf]
      %v698 = vld [vmem:[%s693 + $0x10] sm:$0xf]
      %v699 = vld [vmem:[%s693 + $0x14] sm:$0xf]
      %v700 = vld [vmem:[%s693 + $0x18] sm:$0xf]
      %v701 = vld [vmem:[%s693 + $0x1c] sm:$0xf]
      %v702 = vld [vmem:[%s693 + $0x20] sm:$0xf]
      %v703 = vld [vmem:[%s693 + $0x24] sm:$0xf]
      %v704 = vld [vmem:[%s693 + $0x28] sm:$0xf]
      %v705 = vld [vmem:[%s693 + $0x2c] sm:$0xf]
      %v706 = vld [vmem:[%s693 + $0x30] sm:$0xf]
      %v707 = vld [vmem:[%s693 + $0x34] sm:$0xf]
      %v708 = vld [vmem:[%s693 + $0x38] sm:$0xf]
      %v709 = vld [vmem:[%s693 + $0x3c] sm:$0xf]
      %v713 = vunpack.c.l.b16 %v674
      %v714 = vunpack.c.l.b16 %v675
      %v715 = vunpack.c.l.b16 %v692
      %v716 = vpack.c.b16 %v714, %v713
      %v717 = vpack.c.b16 %v715, %v715
      %v719 = vshrl.u32 %v716, 16
      %v721 = vshll.u32 %v716, 16
      %v723 = vrot.slane %v721, 1
      %v724 = vor.u32 %v719, %v723
      %v726 = vshll.u32 %v717, 16
      %v728 = vrot.slane %v726, 1
      %v729 = vsel %vm320, %v724, %v728
      %v747 = vunpack.c.l.b16 %v694
      %v748 = vunpack.c.l.b16 %v695
      %v749 = vunpack.c.l.b16 %v696
      %v750 = vunpack.c.l.b16 %v697
      %v751 = vunpack.c.l.b16 %v698
      %v752 = vunpack.c.l.b16 %v699
      %v753 = vunpack.c.l.b16 %v700
      %v754 = vunpack.c.l.b16 %v701
      %v755 = vunpack.c.l.b16 %v702
      %v756 = vunpack.c.l.b16 %v703
      %v757 = vunpack.c.l.b16 %v704
      %v758 = vunpack.c.l.b16 %v705
      %v759 = vunpack.c.l.b16 %v706
      %v760 = vunpack.c.l.b16 %v707
      %v761 = vunpack.c.l.b16 %v708
      %v762 = vunpack.c.l.b16 %v709
      %v763 = vpack.c.b16 %v748, %v747
      %v764 = vpack.c.b16 %v750, %v749
      %v765 = vpack.c.b16 %v752, %v751
      %v766 = vpack.c.b16 %v754, %v753
      %v767 = vpack.c.b16 %v756, %v755
      %v768 = vpack.c.b16 %v758, %v757
      %v769 = vpack.c.b16 %v760, %v759
      %v770 = vpack.c.b16 %v762, %v761
      %779 = vmatprep.subr.bf16.mxu0 0
      %780 = vmatpush1.bf16.msra.mxu0 %v763
      %781 = vmatprep.subr.bf16.mxu0 0
      %782 = vmatpush1.bf16.msra.mxu0 %v764
      %783 = vmatprep.subr.bf16.mxu0 0
      %784 = vmatpush1.bf16.msra.mxu0 %v765
      %785 = vmatprep.subr.bf16.mxu0 0
      %786 = vmatpush1.bf16.msra.mxu0 %v766
      %787 = vmatprep.subr.bf16.mxu0 0
      %788 = vmatpush1.bf16.msra.mxu0 %v767
      %789 = vmatprep.subr.bf16.mxu0 0
      %790 = vmatpush1.bf16.msra.mxu0 %v768
      %791 = vmatprep.subr.bf16.mxu0 0
      %792 = vmatpush1.bf16.msra.mxu0 %v769
      %793 = vmatprep.subr.bf16.mxu0 0
      %794 = vmatpush1.bf16.msra.mxu0 %v770
      %795 = vmatprep.subr.bf16.mxu0 0
      %796 = vmatpush1.bf16.msra.mxu0 0
      %797 = vmatprep.subr.bf16.mxu0 0
      %798 = vmatpush1.bf16.msra.mxu0 0
      %799 = vmatprep.subr.bf16.mxu0 0
      %800 = vmatpush1.bf16.msra.mxu0 0
      %801 = vmatprep.subr.bf16.mxu0 0
      %802 = vmatpush1.bf16.msra.mxu0 0
      %803 = vmatprep.subr.bf16.mxu0 0
      %804 = vmatpush1.bf16.msra.mxu0 0
      %805 = vmatprep.subr.bf16.mxu0 0
      %806 = vmatpush1.bf16.msra.mxu0 0
      %807 = vmatprep.subr.bf16.mxu0 0
      %808 = vmatpush1.bf16.msra.mxu0 0
      %809 = vmatprep.subr.bf16.mxu0 0
      %810 = vmatpush1.bf16.msra.mxu0 0
      %811 = vmatprep.mubr.bf16.mxu0 0
      %812 = vmatmul.mubr.bf16.gmra.mrb[0].mxu0 %v729
      %v813 = vpop.f32.mrb[0].mxu0
      %v814 = vadd.f32 0.0, %v813
      %v815 = vpop.f32.mrb[0].mxu0
      %v816 = vpop.f32.mrb[0].mxu0
      %v817 = vadd.f32 0.0, %v816
      %v818 = vpop.f32.mrb[0].mxu0
      %819 = vdwg.mxu0
      %v837 = vunpack.c.l.b16 %v676
      %v838 = vunpack.c.l.b16 %v677
      %v839 = vunpack.c.l.b16 %v678
      %v840 = vunpack.c.l.b16 %v679
      %v841 = vunpack.c.l.b16 %v680
      %v842 = vunpack.c.l.b16 %v681
      %v843 = vunpack.c.l.b16 %v682
      %v844 = vunpack.c.l.b16 %v683
      %v845 = vunpack.c.l.b16 %v684
      %v846 = vunpack.c.l.b16 %v685
      %v847 = vunpack.c.l.b16 %v686
      %v848 = vunpack.c.l.b16 %v687
      %v849 = vunpack.c.l.b16 %v688
      %v850 = vunpack.c.l.b16 %v689
      %v851 = vunpack.c.l.b16 %v690
      %v852 = vunpack.c.l.b16 %v691
      %v853 = vpack.c.b16 %v838, %v837
      %v854 = vpack.c.b16 %v840, %v839
      %v855 = vpack.c.b16 %v842, %v841
      %v856 = vpack.c.b16 %v844, %v843
      %v857 = vpack.c.b16 %v846, %v845
      %v858 = vpack.c.b16 %v848, %v847
      %v859 = vpack.c.b16 %v850, %v849
      %v860 = vpack.c.b16 %v852, %v851
      %869 = vmatprep.subr.bf16.mxu0 0
      %870 = vmatpush1.bf16.msra.mxu0 %v853
      %871 = vmatprep.subr.bf16.mxu0 0
      %872 = vmatpush1.bf16.msra.mxu0 %v854
      %873 = vmatprep.subr.bf16.mxu0 0
      %874 = vmatpush1.bf16.msra.mxu0 %v855
      %875 = vmatprep.subr.bf16.mxu0 0
      %876 = vmatpush1.bf16.msra.mxu0 %v856
      %877 = vmatprep.subr.bf16.mxu0 0
      %878 = vmatpush1.bf16.msra.mxu0 %v857
      %879 = vmatprep.subr.bf16.mxu0 0
      %880 = vmatpush1.bf16.msra.mxu0 %v858
      %881 = vmatprep.subr.bf16.mxu0 0
      %882 = vmatpush1.bf16.msra.mxu0 %v859
      %883 = vmatprep.subr.bf16.mxu0 0
      %884 = vmatpush1.bf16.msra.mxu0 %v860
      %885 = vmatprep.subr.bf16.mxu0 0
      %886 = vmatpush1.bf16.msra.mxu0 0
      %887 = vmatprep.subr.bf16.mxu0 0
      %888 = vmatpush1.bf16.msra.mxu0 0
      %889 = vmatprep.subr.bf16.mxu0 0
      %890 = vmatpush1.bf16.msra.mxu0 0
      %891 = vmatprep.subr.bf16.mxu0 0
      %892 = vmatpush1.bf16.msra.mxu0 0
      %893 = vmatprep.subr.bf16.mxu0 0
      %894 = vmatpush1.bf16.msra.mxu0 0
      %895 = vmatprep.subr.bf16.mxu0 0
      %896 = vmatpush1.bf16.msra.mxu0 0
      %897 = vmatprep.subr.bf16.mxu0 0
      %898 = vmatpush1.bf16.msra.mxu0 0
      %899 = vmatprep.subr.bf16.mxu0 0
      %900 = vmatpush1.bf16.msra.mxu0 0
      %901 = vmatprep.mubr.bf16.mxu0 0
      %902 = vmatmul.mubr.bf16.gmra.mrb[0].mxu0 %v716
      %v903 = vpop.f32.mrb[0].mxu0
      %v904 = vadd.f32 %v814, %v903
      %v905 = vpop.f32.mrb[0].mxu0
      %v906 = vpop.f32.mrb[0].mxu0
      %v907 = vadd.f32 %v817, %v906
      %v908 = vpop.f32.mrb[0].mxu0
      %909 = vdwg.mxu0
      %v910 = vld [vmem:[#allocation3] sm:$0xe]
      %s911 = scalar_lea.vmem %s3, 128
      %v912 = vld [vmem:[%s911] sm:$0xf]
      %v913 = vld [vmem:[%s911 + $0x4] sm:$0xf]
      %v914 = vld [vmem:[%s911 + $0x8] sm:$0xf]
      %v915 = vld [vmem:[%s911 + $0xc] sm:$0xf]
      %v916 = vld [vmem:[%s911 + $0x10] sm:$0xf]
      %v917 = vld [vmem:[%s911 + $0x14] sm:$0xf]
      %v918 = vld [vmem:[%s911 + $0x18] sm:$0xf]
      %v919 = vld [vmem:[%s911 + $0x1c] sm:$0xf]
      %v920 = vld [vmem:[%s911 + $0x20] sm:$0xf]
      %v921 = vld [vmem:[%s911 + $0x24] sm:$0xf]
      %v922 = vld [vmem:[%s911 + $0x28] sm:$0xf]
      %v923 = vld [vmem:[%s911 + $0x2c] sm:$0xf]
      %v924 = vld [vmem:[%s911 + $0x30] sm:$0xf]
      %v925 = vld [vmem:[%s911 + $0x34] sm:$0xf]
      %v926 = vld [vmem:[%s911 + $0x38] sm:$0xf]
      %v927 = vld [vmem:[%s911 + $0x3c] sm:$0xf]
      %v929 = vunpack.c.l.b16 %v910
      %v930 = vpack.c.b16 %v714, %v929
      %v931 = vrot.slane %v930, 1
      %v932 = vrot.slane %v717, 1
      %v933 = vsel %vm534, %v931, %v932
      %v951 = vunpack.c.l.b16 %v912
      %v952 = vunpack.c.l.b16 %v913
      %v953 = vunpack.c.l.b16 %v914
      %v954 = vunpack.c.l.b16 %v915
      %v955 = vunpack.c.l.b16 %v916
      %v956 = vunpack.c.l.b16 %v917
      %v957 = vunpack.c.l.b16 %v918
      %v958 = vunpack.c.l.b16 %v919
      %v959 = vunpack.c.l.b16 %v920
      %v960 = vunpack.c.l.b16 %v921
      %v961 = vunpack.c.l.b16 %v922
      %v962 = vunpack.c.l.b16 %v923
      %v963 = vunpack.c.l.b16 %v924
      %v964 = vunpack.c.l.b16 %v925
      %v965 = vunpack.c.l.b16 %v926
      %v966 = vunpack.c.l.b16 %v927
      %v967 = vpack.c.b16 %v952, %v951
      %v968 = vpack.c.b16 %v954, %v953
      %v969 = vpack.c.b16 %v956, %v955
      %v970 = vpack.c.b16 %v958, %v957
      %v971 = vpack.c.b16 %v960, %v959
      %v972 = vpack.c.b16 %v962, %v961
      %v973 = vpack.c.b16 %v964, %v963
      %v974 = vpack.c.b16 %v966, %v965
      %983 = vmatprep.subr.bf16.mxu0 0
      %984 = vmatpush1.bf16.msra.mxu0 %v967
      %985 = vmatprep.subr.bf16.mxu0 0
      %986 = vmatpush1.bf16.msra.mxu0 %v968
      %987 = vmatprep.subr.bf16.mxu0 0
      %988 = vmatpush1.bf16.msra.mxu0 %v969
      %989 = vmatprep.subr.bf16.mxu0 0
      %990 = vmatpush1.bf16.msra.mxu0 %v970
      %991 = vmatprep.subr.bf16.mxu0 0
      %992 = vmatpush1.bf16.msra.mxu0 %v971
      %993 = vmatprep.subr.bf16.mxu0 0
      %994 = vmatpush1.bf16.msra.mxu0 %v972
      %995 = vmatprep.subr.bf16.mxu0 0
      %996 = vmatpush1.bf16.msra.mxu0 %v973
      %997 = vmatprep.subr.bf16.mxu0 0
      %998 = vmatpush1.bf16.msra.mxu0 %v974
      %999 = vmatprep.subr.bf16.mxu0 0
      %1000 = vmatpush1.bf16.msra.mxu0 0
      %1001 = vmatprep.subr.bf16.mxu0 0
      %1002 = vmatpush1.bf16.msra.mxu0 0
      %1003 = vmatprep.subr.bf16.mxu0 0
      %1004 = vmatpush1.bf16.msra.mxu0 0
      %1005 = vmatprep.subr.bf16.mxu0 0
      %1006 = vmatpush1.bf16.msra.mxu0 0
      %1007 = vmatprep.subr.bf16.mxu0 0
      %1008 = vmatpush1.bf16.msra.mxu0 0
      %1009 = vmatprep.subr.bf16.mxu0 0
      %1010 = vmatpush1.bf16.msra.mxu0 0
      %1011 = vmatprep.subr.bf16.mxu0 0
      %1012 = vmatpush1.bf16.msra.mxu0 0
      %1013 = vmatprep.subr.bf16.mxu0 0
      %1014 = vmatpush1.bf16.msra.mxu0 0
      %1015 = vmatprep.mubr.bf16.mxu0 0
      %1016 = vmatmul.mubr.bf16.gmra.mrb[0].mxu0 %v933
      %v1017 = vpop.f32.mrb[0].mxu0
      %v1018 = vadd.f32 0.0, %v1017
      %v1019 = vpop.f32.mrb[0].mxu0
      %v1020 = vpop.f32.mrb[0].mxu0
      %v1021 = vadd.f32 0.0, %v1020
      %v1022 = vpop.f32.mrb[0].mxu0
      %1023 = vdwg.mxu0
      %v1024 = vadd.f32 %v904, %v1018
      %v1025 = vadd.f32 %v907, %v1021
      %v1026 = vld [vmem:[%s4] sm:$0x1]
      %v1028 = vlaneseq
      %v1029 = vshrl.u32 %v1028, 7
      %v1030 = vsub.s32 0, %v1029
      %v1031 = vrot.slane %v1026, %v1030
      %v1033 = vadd.f32 %v1024, %v1031
      %v1034 = vadd.f32 %v1025, %v1031
      %v1035 = vmax.f32 %v1033, 0.0
      %v1036 = vmax.f32 %v1034, 0.0
      %1037 = vst [vmem:[%s224] sm:$0xff] %v1035
      %1038 = vst [vmem:[%s224 + $0x8] sm:$0xff] %v1036
      %p1039 = scmp.lt.s32.totalorder %s16, 1
      %s1040 = scalar_select %p1039, %s16, 1
      %s1041 = smul.addr %s1040, 2
      %s1042 = smul.addr %s1041, 8
      %s1043 = scalar_lea.vmem %s5, %s1042
      // Predicated region
      $region41: #{inconv_forward.1} parent=39 // pred_check
        %p1044 = pneg %p144
      $region42: #{inconv_forward.1} parent=39 // pred_check_branch
        %1046 = sbr.rel (%p1044) target = $region44
      $region43: #{inconv_forward.1} parent=39 // pred_region
        _
      $region44: #{inconv_forward.1} parent=39 // pred_fallthru
        _
    $region40: #{inconv_forward.1} parent=5 // pred_fallthru
      _
    %p1047 = scmp.le.s32.totalorder 2, %s11
    // Predicated region
    $region45: #{inconv_forward.1} parent=5 // pred_check
      %p1048 = pneg %p1047
    $region46: #{inconv_forward.1} parent=5 // pred_check_branch
      %1050 = sbr.rel (%p1048) target = $region48
    $region47: #{inconv_forward.1} parent=5 // pred_region
      %s1051 = ssub.s32 %s11, 2
      // Predicated region
      $region49: #{inconv_forward.1} parent=47 // pred_check
        %p1052 = pneg %p150
      $region50: #{inconv_forward.1} parent=47 // pred_check_branch
        %1054 = sbr.rel (%p1052) target = $region52
      $region51: #{inconv_forward.1} parent=47 // pred_region
        %p1055 = scmp.lt.s32.totalorder %s17, 1
        %s1056 = scalar_select %p1055, %s17, 1
        %s1057 = smul.addr %s1056, 2
        %s1058 = smul.addr %s1057, 8
        %s1059 = scalar_lea.vmem %s5, %s1058
      $region52: #{inconv_forward.1} parent=47 // pred_fallthru
        _
    $region48: #{inconv_forward.1} parent=5 // pred_fallthru
      _
  $region6: #{inconv_forward.1} parent=0 // loop_footer
    %s15 = sadd.s32 1, %s11
  $region7: #{inconv_forward.1} parent=0 // loop_footer_branch
    %10 = sbr.rel target = $region3
  $region8: #{inconv_forward.1} parent=0 // loop_exit
    _

</llo_original>
